<compile_context>
chip_gen: v5e
topology: v5e:2x2
jax: 0.10.0
libtpu: 0.0.40
codegen_flags: <defaults>
</compile_context>

<pallas_src>
import math

import jax
import jax.numpy as jnp
from jax import lax
from jax.experimental import pallas as pl
from jax.experimental.pallas import tpu as pltpu


def _device_kind():
    try:
        return jax.devices()[0].device_kind.lower()
    except Exception:
        return ""


def _make_nse_kernel(tile_t, lane_width, rows_real):
    """Builds the per-tile partial-sum kernel with static constants baked in."""
    n_chunks = tile_t // 8

    def kernel(p_ref, t_ref, out_ref):
        i = pl.program_id(1)

        @pl.when(i == 0)
        def _():
            out_ref[...] = jnp.zeros_like(out_ref)

        # Global packed-row offset of this tile, from the *unclamped* grid position.
        # Tiles overhanging rows_real (time-axis tail, or blocks duplicated by the
        # clamped index_map) are zeroed by the row mask, so unspecified out-of-bounds
        # input values never reach the accumulator.
        block_idx = pl.program_id(0) * pl.num_programs(1) + i
        row_start = block_idx * tile_t

        p = p_ref[...].astype(jnp.float32)
        t = t_ref[...].astype(jnp.float32)

        rows = row_start + lax.broadcasted_iota(jnp.int32, (tile_t, lane_width), 0)
        valid = (t == t) & (rows < rows_real)          # finite target AND real row
        r = jnp.where(valid, p - t, 0.0)               # NaN targets / pad rows contribute 0
        contrib = r * r                                # raw squared residual (std weight deferred)

        # Fold the tile to one vreg-shaped (8, lane) partial sum: sublane-group adds on
        # the VPU, then a full unmasked vreg accumulate into the resident output block.
        # (If a bundle dump ever shows `contrib` materialized in VMEM, restructure this
        #  as an unrolled fori_loop over 8-row chunks with a vreg accumulator.)
        out_ref[...] += contrib.reshape(n_chunks, 8, lane_width).sum(axis=0)

    return kernel


def nse_loss_batch33(output, target, std, eps=0.1,
                     max_block_bytes=None, n_split=None):
    """JAX/Pallas equivalent of NSELossBatch33(std, eps).forward(output, target).

    `output` / `target` may be (nt, nb, ny) (module interface; feature 0 is sliced here)
    or already-contiguous (nt, nb) feature-0 arrays (preferred fast path — produce
    feature 0 contiguously upstream to avoid the strided-slice copy).
    """
    p0 = output[:, :, 0] if output.ndim == 3 else output
    t0 = target[:, :, 0] if target.ndim == 3 else target
    nt, nb = t0.shape

    kind = _device_kind()
    if max_block_bytes is None:
        max_block_bytes = (4 << 20) if ("v6" in kind or "v7" in kind) else (2 << 20)

    # --- lane packing: fold `rep` consecutive time steps into the lane axis -----------
    rep = 128 // math.gcd(nb, 128)          # smallest rep s.t. nb*rep % 128 == 0
    lane_width = nb * rep
    rows_real = -(-nt // rep)               # packed rows holding real data
    nt_rep = rows_real * rep

    # Pad only to the rep boundary (< rep rows): slice + tiny pad + reshape fuse into a
    # single pass; with contiguous (nt, nb) input and nt % rep == 0 there is no copy.
    pad = nt_rep - nt
    if pad:
        p0 = jnp.pad(p0, ((0, pad), (0, 0)))
        t0 = jnp.pad(t0, ((0, pad), (0, 0)), constant_values=jnp.nan)
    p_packed = p0.reshape(rows_real, lane_width)
    t_packed = t0.reshape(rows_real, lane_width)

    # --- tile sizing -------------------------------------------------------------------
    itemsize = max(jnp.dtype(p_packed.dtype).itemsize, jnp.dtype(t_packed.dtype).itemsize)
    row_align = 8 * max(1, 4 // itemsize)   # 8 rows (f32), 16 (bf16), 32 (int8/fp8)
    bytes_per_row = lane_width * itemsize
    budget_rows = max(row_align, (max_block_bytes // bytes_per_row) // row_align * row_align)
    rows_aligned = -(-rows_real // row_align) * row_align
    tile_t = max(row_align, min(budget_rows, rows_aligned))
    tiles_total = -(-rows_real // tile_t)

    # --- megacore split (outer "parallel" axis): only useful on 2-TC v7x ----------------
    if n_split is None:
        n_split = 2 if "v7" in kind else 1
    if tiles_total < 2 * n_split:            # require >= 2 full tiles per split
        n_split = 1
    tiles_per_split = -(-tiles_total // n_split)

    def in_index_map(c, i):
        # Clamp fully out-of-range blocks onto the last real tile; the in-kernel row mask
        # (using the unclamped index) makes their contribution exactly zero.
        return (jnp.minimum(c * tiles_per_split + i, tiles_total - 1), 0)

    # --- VMEM budget: 2 inputs x 2 buffers x block + f32 intermediates + slack ----------
    block_in_bytes = tile_t * lane_width * itemsize
    block_f32_bytes = tile_t * lane_width * 4
    vmem_limit = min(4 * block_in_bytes + 4 * block_f32_bytes + (2 << 20), 64 << 20)

    partial = pl.pallas_call(
        _make_nse_kernel(tile_t, lane_width, rows_real),
        out_shape=jax.ShapeDtypeStruct((n_split * 8, lane_width), jnp.float32),
        grid_spec=pltpu.PrefetchScalarGridSpec(
            num_scalar_prefetch=0,
            grid=(n_split, tiles_per_split),
            in_specs=[
                pl.BlockSpec((tile_t, lane_width), in_index_map),
                pl.BlockSpec((tile_t, lane_width), in_index_map),
            ],
            out_specs=pl.BlockSpec((8, lane_width), lambda c, i: (c, 0)),
        ),
        compiler_params=pltpu.CompilerParams(
            dimension_semantics=("parallel", "arbitrary"),
            vmem_limit_bytes=vmem_limit,
        ),
    )(p_packed, t_packed)

    # --- tiny epilogue in plain JAX ------------------------------------------------------
    lane_sums = jnp.sum(partial, axis=0)                         # (lane_width,)
    basin_sq_sums = jnp.sum(lane_sums.reshape(rep, nb), axis=0)  # (nb,) masked sum_t (p-t)^2
    std_v = jnp.asarray(std, jnp.float32).reshape(-1)[:nb]
    inv_w = 1.0 / ((std_v + eps) ** 2)                           # per-basin 1/(std+eps)^2
    loss_per_basin = basin_sq_sums * inv_w / jnp.float32(nt)     # mean over ALL nt steps
    mean_loss = jnp.mean(loss_per_basin)
    return mean_loss, loss_per_basin


def _reference(output, target, std, eps=0.1):
    """Pure-JAX mirror of NSELossBatch33.forward."""
    nt, nb, _ = target.shape
    p0 = output[:, :, 0].astype(jnp.float32)
    t0 = target[:, :, 0].astype(jnp.float32)
    stdw = jnp.asarray(std, jnp.float32).reshape(-1)[:nb][None, :]
    valid = ~jnp.isnan(t0)
    norm = jnp.where(valid, (p0 - t0) ** 2 / (stdw + eps) ** 2, 0.0)
    loss_per_basin = jnp.mean(norm, axis=0)     # zeros at NaN positions, divide by nt
    return jnp.mean(loss_per_basin), loss_per_basin


if __name__ == "__main__":
    key = jax.random.PRNGKey(0)
    k1, k2, k3, k4 = jax.random.split(key, 4)

    # nt not a multiple of rep (=8 for nb=16) so both the tiny rep-boundary pad and the
    # in-kernel tail row mask are exercised.
    nt, nb, ny = 203, 16, 3

    std = jax.random.uniform(k1, (nb,), jnp.float32, 0.5, 2.0)   # per-basin std (module arg)
    output = jax.random.normal(k2, (nt, nb, ny), jnp.float32)
    target = jax.random.normal(k3, (nt, nb, ny), jnp.float32)

    # Inject NaNs into target feature 0 (including one fully-NaN basin) to exercise the mask.
    nan_mask = jax.random.bernoulli(k4, 0.2, (nt, nb))
    nan_mask = nan_mask.at[:, 3].set(True)
    t0_nan = jnp.where(nan_mask, jnp.nan, target[:, :, 0])
    target = target.at[:, :, 0].set(t0_nan)

    # Small max_block_bytes so the tiny test still exercises the multi-tile pipeline and
    # the overhanging last tile; real workloads use the per-generation default.
    mean_loss, loss_per_basin = nse_loss_batch33(
        output, target, std, eps=0.1, max_block_bytes=4096)
    mean_loss = jax.block_until_ready(mean_loss)
    loss_per_basin = jax.block_until_ready(loss_per_basin)

    ref_mean, ref_basin = _reference(output, target, std, eps=0.1)
    ref_mean = jax.block_until_ready(ref_mean)

    assert jnp.allclose(mean_loss, ref_mean, rtol=1e-4, atol=1e-6), (mean_loss, ref_mean)
    assert jnp.allclose(loss_per_basin, ref_basin, rtol=1e-4, atol=1e-6), (loss_per_basin, ref_basin)
    print("KERNEL_OK")
</pallas_src>

<mosaic_0001>
module attributes {stable_mosaic.version = 11 : i64} {
  func.func @kernel(%arg0: i32, %arg1: i32, %arg2: memref<8x128xf32, #tpu.memory_space<vmem>>, %arg3: memref<8x128xf32, #tpu.memory_space<vmem>>, %arg4: memref<8x128xf32, #tpu.memory_space<vmem>>) attributes {dimension_semantics = [#tpu.dimension_semantics<parallel>, #tpu.dimension_semantics<arbitrary>], iteration_bounds = array<i64: 1, 4>, scalar_prefetch = 0 : i64, scratch_operands = 0 : i64, tpu.core_type = #tpu.core_type<tc>, window_params = [{transform_indices = @transform_0, window_bounds = array<i64: 8, 128>}, {transform_indices = @transform_1, window_bounds = array<i64: 8, 128>}, {transform_indices = @transform_2, window_bounds = array<i64: 8, 128>}]} {
    %c0_i32 = arith.constant 0 : i32
    %0 = arith.cmpi eq, %arg1, %c0_i32 : i32
    %1 = arith.extui %0 : i1 to i32
    %c0_i32_0 = arith.constant 0 : i32
    %2 = arith.cmpi ne, %1, %c0_i32_0 : i32
    scf.if %2 {
      %cst_9 = arith.constant 0.000000e+00 : f32
      %24 = vector.broadcast %cst_9 : f32 to vector<8x128xf32>
      %c0_10 = arith.constant 0 : index
      %c0_11 = arith.constant 0 : index
      %25 = vector.load %arg4[%c0_10, %c0_11] : memref<8x128xf32, #tpu.memory_space<vmem>>, vector<8x128xf32>
      tpu.vector_store %arg4[%c0_10, %c0_11], %24 {strides = array<i32>} : memref<8x128xf32, #tpu.memory_space<vmem>>, vector<8x128xf32>,
    } else {
    }
    %c4_i32 = arith.constant 4 : i32
    %3 = arith.muli %arg0, %c4_i32 : i32
    %4 = arith.addi %3, %arg1 : i32
    %c8_i32 = arith.constant 8 : i32
    %5 = arith.muli %4, %c8_i32 : i32
    %c0 = arith.constant 0 : index
    %c0_1 = arith.constant 0 : index
    %6 = vector.load %arg2[%c0, %c0_1] : memref<8x128xf32, #tpu.memory_space<vmem>>, vector<8x128xf32>
    %c0_2 = arith.constant 0 : index
    %c0_3 = arith.constant 0 : index
    %7 = vector.load %arg3[%c0_2, %c0_3] : memref<8x128xf32, #tpu.memory_space<vmem>>, vector<8x128xf32>
    %8 = tpu.iota {dimensions = array<i32: 0>} : vector<8x128xi32>
    %9 = vector.broadcast %5 : i32 to vector<8x128xi32>
    %10 = arith.addi %9, %8 : vector<8x128xi32>
    %11 = arith.cmpf oeq, %7, %7 : vector<8x128xf32>
    %c26_i32 = arith.constant 26 : i32
    %12 = vector.broadcast %c26_i32 : i32 to vector<8x128xi32>
    %13 = arith.cmpi slt, %10, %12 : vector<8x128xi32>
    %14 = arith.andi %11, %13 : vector<8x128xi1>
    %15 = arith.subf %6, %7 : vector<8x128xf32>
    %cst = arith.constant 0.000000e+00 : f32
    %16 = vector.broadcast %cst : f32 to vector<8x128xf32>
    %17 = arith.select %14, %15, %16 : vector<8x128xi1>, vector<8x128xf32>
    %18 = arith.mulf %17, %17 : vector<8x128xf32>
    %c0_4 = arith.constant 0 : index
    %c0_5 = arith.constant 0 : index
    %19 = vector.load %arg4[%c0_4, %c0_5] : memref<8x128xf32, #tpu.memory_space<vmem>>, vector<8x128xf32>
    %20 = vector.shape_cast %18 : vector<8x128xf32> to vector<1x8x128xf32>
    %cst_6 = arith.constant dense<0.000000e+00> : vector<8x128xf32>
    %21 = vector.multi_reduction <add>, %20, %cst_6 [0] : vector<1x8x128xf32> to vector<8x128xf32>
    %22 = arith.addf %19, %21 : vector<8x128xf32>
    %c0_7 = arith.constant 0 : index
    %c0_8 = arith.constant 0 : index
    %23 = vector.load %arg4[%c0_7, %c0_8] : memref<8x128xf32, #tpu.memory_space<vmem>>, vector<8x128xf32>
    tpu.vector_store %arg4[%c0_7, %c0_8], %22 {strides = array<i32>} : memref<8x128xf32, #tpu.memory_space<vmem>>, vector<8x128xf32>,
    return
  }
  func.func @transform_0(%arg0: i32, %arg1: i32) -> (i32, i32) {
    %c4_i32 = arith.constant 4 : i32
    %0 = arith.muli %arg0, %c4_i32 : i32
    %1 = arith.addi %0, %arg1 : i32
    %c3_i32 = arith.constant 3 : i32
    %2 = arith.minsi %1, %c3_i32 : i32
    %c0_i32 = arith.constant 0 : i32
    %c0_i32_0 = arith.constant 0 : i32
    return %2, %c0_i32 : i32, i32
  }
  func.func @transform_1(%arg0: i32, %arg1: i32) -> (i32, i32) {
    %c4_i32 = arith.constant 4 : i32
    %0 = arith.muli %arg0, %c4_i32 : i32
    %1 = arith.addi %0, %arg1 : i32
    %c3_i32 = arith.constant 3 : i32
    %2 = arith.minsi %1, %c3_i32 : i32
    %c0_i32 = arith.constant 0 : i32
    %c0_i32_0 = arith.constant 0 : i32
    return %2, %c0_i32 : i32, i32
  }
  func.func @transform_2(%arg0: i32, %arg1: i32) -> (i32, i32) {
    %c0_i32 = arith.constant 0 : i32
    %c0_i32_0 = arith.constant 0 : i32
    return %arg0, %c0_i32 : i32, i32
  }
}

</mosaic_0001>

<llo_original>
// kernel: tpu_custom_call.1
$region0: #{tpu_custom_call.1}
  #allocation0 [shape = 'u32[]', space=smem, size = 0x4, offset = 0x4, fixed_abs, tag = 'smem constant byte address 0x4 - core index']
  #allocation1 [shape = 'u32[72,128]{1,0:T(1,128)}', space=vmem, size = 0x9000, scoped, tag = 'internal scratch']
  %s0 = inlined_call_operand.hbm [shape: f32[26,128], index: 0, kind: input, shape index: {}]
  %s1 = inlined_call_operand.hbm [shape: f32[26,128], index: 1, kind: input, shape index: {}]
  %s2 = inlined_call_operand.hbm [shape: f32[8,128], index: 2, kind: output, shape index: {}]
  %s3 = sld [smem:[#allocation0]]
  $region53: #{tpu_custom_call.1} parent=0
    _
  %s5 = ssub.s32 1, %s3
  %s6 = scalar_select 0, %s5, %s3
  $region1: #{tpu_custom_call.1} parent=0
    #allocation2 [shape = 'u8[8192]{0}', space=vmem, size = 0x2000, scoped, tag = 'input window, operand 0']
    #allocation3 [shape = 's32[2]{0}', space=sflag, size = 0x8, scoped, tag = 'scoped memory for tpu_custom_call.1']
    #allocation4 [shape = 's32[2]{0}', space=sflag, size = 0x8, scoped, tag = 'scoped memory for tpu_custom_call.1']
    #allocation5 [shape = 'u8[8192]{0}', space=vmem, size = 0x2000, scoped, tag = 'input window, operand 1']
    #allocation6 [shape = 's32[2]{0}', space=sflag, size = 0x8, scoped, tag = 'scoped memory for tpu_custom_call.1']
    #allocation7 [shape = 'u8[4096]{0}', space=vmem, size = 0x1000, scoped, tag = 'output window, operand 0, single buffered']
    %7 = vsyncpa [#allocation3], 0
    %s8 = scalar_lea.sflag [#allocation3], 1
    %9 = vsyncpa %s8, 0
    %10 = vsyncpa [#allocation6], 0
    %s11 = scalar_lea.sflag [#allocation6], 1
    %12 = vsyncpa %s11, 0
    %13 = vsyncpa [#allocation4], 0
    loop: start=0, step=1, limit=6
    $region2: #{tpu_custom_call.1} parent=1 // loop_pre_header
      _
    $region3: #{tpu_custom_call.1} parent=1 // loop_header
      %s15 = sphi 0, %s19
      %p16 = scmp.ge.s32.totalorder %s15, 6
      %s22 = sphi 0, %s34
      %s23 = sphi 0, %s30
      %s24 = sphi 0, %s22
      %s25 = sphi 0, %s23
      %s26 = sphi 0, %s24
      %s27 = sphi 0, %s25
      %s45 = sphi 0, %s47
      %s48 = sphi 0, %s45
      %s49 = sphi 0, %s48
      %s65 = sphi 0, %s49
      %s79 = sphi 0, %s81
      %s82 = sphi 0, %s79
      %s83 = sphi 0, %s82
      %s99 = sphi 0, %s83
      %s105 = sphi 0, %s107
      %s108 = sphi 0, %s105
      %s109 = sphi 0, %s108
      %s125 = sphi 0, %s109
    $region4: #{tpu_custom_call.1} parent=1 // loop_header_branch
      %18 = sbr.rel (%p16) target = $region8
    $region5: #{tpu_custom_call.1} parent=1 // loop_body
      %s20 = ssub.s32 %s15, 1
      %s21 = ssub.s32 %s15, 2
      %s28 = sadd.s32 1, %s23
      %p29 = scmp.ge.s32.totalorder %s28, 4
      %s30 = scalar_select %p29, 0, %s28
      %s31 = sadd.s32 1, %s22
      %s32 = scalar_select %p29, %s31, %s22
      %p33 = scmp.ge.s32.totalorder %s32, 1
      %s34 = scalar_select %p33, 0, %s32
      %s35 = smul.u32 %s22, 4
      %s36 = sadd.s32 %s35, %s23
      %p37 = scmp.lt.s32.totalorder %s36, 3
      %s38 = scalar_select %p37, %s36, 3
      %s39 = smul.u32 %s34, 4
      %s40 = sadd.s32 %s39, %s30
      %p41 = scmp.lt.s32.totalorder %s40, 3
      %s42 = scalar_select %p41, %s40, 3
      %s43 = ssub.s32 %s38, %s42
      %p44 = scmp.eq.s32.totalorder %s43, 0
      %s46 = sadd.s32 %s45, 1
      %s47 = scalar_select %p44, %s45, %s46
      %p50 = pneg %p44
      %p51 = scmp.eq.s32.totalorder %s15, 3
      %p52 = por %p50, %p51
      %p53 = scmp.ne.s32.totalorder %s45, %s48
      %p54 = scmp.eq.s32.totalorder %s15, 0
      %p55 = por %p53, %p54
      %p56 = scmp.ne.s32.totalorder %s45, %s48
      %p57 = scmp.eq.s32.totalorder %s20, 3
      %p58 = por %p56, %p57
      %p59 = scmp.ne.s32.totalorder %s48, %s49
      %p60 = scmp.eq.s32.totalorder %s20, 0
      %p61 = por %p59, %p60
      %p62 = scmp.ne.s32.totalorder %s48, %s49
      %p63 = scmp.eq.s32.totalorder %s21, 3
      %p64 = por %p62, %p63
      %p66 = scmp.ne.s32.totalorder %s49, %s65
      %p67 = scmp.eq.s32.totalorder %s21, 0
      %p68 = por %p66, %p67
      %s69 = smul.u32 %s22, 4
      %s70 = sadd.s32 %s69, %s23
      %p71 = scmp.lt.s32.totalorder %s70, 3
      %s72 = scalar_select %p71, %s70, 3
      %s73 = smul.u32 %s34, 4
      %s74 = sadd.s32 %s73, %s30
      %p75 = scmp.lt.s32.totalorder %s74, 3
      %s76 = scalar_select %p75, %s74, 3
      %s77 = ssub.s32 %s72, %s76
      %p78 = scmp.eq.s32.totalorder %s77, 0
      %s80 = sadd.s32 %s79, 1
      %s81 = scalar_select %p78, %s79, %s80
      %p84 = pneg %p78
      %p85 = scmp.eq.s32.totalorder %s15, 3
      %p86 = por %p84, %p85
      %p87 = scmp.ne.s32.totalorder %s79, %s82
      %p88 = scmp.eq.s32.totalorder %s15, 0
      %p89 = por %p87, %p88
      %p90 = scmp.ne.s32.totalorder %s79, %s82
      %p91 = scmp.eq.s32.totalorder %s20, 3
      %p92 = por %p90, %p91
      %p93 = scmp.ne.s32.totalorder %s82, %s83
      %p94 = scmp.eq.s32.totalorder %s20, 0
      %p95 = por %p93, %p94
      %p96 = scmp.ne.s32.totalorder %s82, %s83
      %p97 = scmp.eq.s32.totalorder %s21, 3
      %p98 = por %p96, %p97
      %p100 = scmp.ne.s32.totalorder %s83, %s99
      %p101 = scmp.eq.s32.totalorder %s21, 0
      %p102 = por %p100, %p101
      %s103 = ssub.s32 %s22, %s34
      %p104 = scmp.eq.s32.totalorder %s103, 0
      %s106 = sadd.s32 %s105, 1
      %s107 = scalar_select %p104, %s105, %s106
      %p110 = pneg %p104
      %p111 = scmp.eq.s32.totalorder %s15, 3
      %p112 = por %p110, %p111
      %p113 = scmp.ne.s32.totalorder %s105, %s108
      %p114 = scmp.eq.s32.totalorder %s15, 0
      %p115 = por %p113, %p114
      %p116 = scmp.ne.s32.totalorder %s105, %s108
      %p117 = scmp.eq.s32.totalorder %s20, 3
      %p118 = por %p116, %p117
      %p119 = scmp.ne.s32.totalorder %s108, %s109
      %p120 = scmp.eq.s32.totalorder %s20, 0
      %p121 = por %p119, %p120
      %p122 = scmp.ne.s32.totalorder %s108, %s109
      %p123 = scmp.eq.s32.totalorder %s21, 3
      %p124 = por %p122, %p123
      %p126 = scmp.ne.s32.totalorder %s109, %s125
      %p127 = scmp.eq.s32.totalorder %s21, 0
      %p128 = por %p126, %p127
      %p129 = scmp.le.s32.totalorder 1, %s15
      %p130 = scmp.lt.s32.totalorder %s15, 5
      %p131 = pnand %p129, %p130
      %p132 = pneg %p131
      // Predicated region
      $region9: #{tpu_custom_call.1} parent=5 // pred_check
        _
      $region10: #{tpu_custom_call.1} parent=5 // pred_check_branch
        %134 = sbr.rel (%p131) target = $region12
      $region11: #{tpu_custom_call.1} parent=5 // pred_region
        %s135 = ssub.s32 %s15, 1
      $region12: #{tpu_custom_call.1} parent=5 // pred_fallthru
        _
      %p136 = scmp.lt.s32.totalorder %s15, 4
      // Predicated region
      $region13: #{tpu_custom_call.1} parent=5 // pred_check
        %p137 = pneg %p136
      $region14: #{tpu_custom_call.1} parent=5 // pred_check_branch
        %139 = sbr.rel (%p137) target = $region16
      $region15: #{tpu_custom_call.1} parent=5 // pred_region
        // Predicated region
        $region17: #{tpu_custom_call.1} parent=15 // pred_check
          %p140 = pneg %p55
        $region18: #{tpu_custom_call.1} parent=15 // pred_check_branch
          %142 = sbr.rel (%p140) target = $region20
        $region19: #{tpu_custom_call.1} parent=15 // pred_region
          %s143 = sand.u32 %s45, 1
          %s144 = scalar_lea.sflag [#allocation3], %s143
          %s145 = sand.u32 %s45, 1
          %s146 = smul.addr %s145, 8
          %s147 = scalar_lea.vmem [#allocation2], %s146
          %s148 = smul.u32 %s22, 4
          %s149 = sadd.s32 %s148, %s23
          %p150 = scmp.lt.s32.totalorder %s149, 3
          %s151 = scalar_select %p150, %s149, 3
          %153 = vsyncadd %s144, 0
          %s154 = smul.addr %s151, 8
          %s155 = scalar_lea.hbm %s0, %s154
          %s157 = sshll.u32 %s155, 4
          %s158 = int_to_ptr.hbm [resolvable:$true] %s157
          %s159 = sshll.u32 %s147, 4
          %s160 = int_to_ptr.vmem [resolvable:$true] %s159
          %162 = dma.hbm_to_vmem [thread:$0]  %s158, 128, %s160, %s144
        $region20: #{tpu_custom_call.1} parent=15 // pred_fallthru
          _
        // Predicated region
        $region21: #{tpu_custom_call.1} parent=15 // pred_check
          %p163 = pneg %p89
        $region22: #{tpu_custom_call.1} parent=15 // pred_check_branch
          %165 = sbr.rel (%p163) target = $region24
        $region23: #{tpu_custom_call.1} parent=15 // pred_region
          %s166 = sand.u32 %s79, 1
          %s167 = scalar_lea.sflag [#allocation6], %s166
          %s168 = sand.u32 %s79, 1
          %s169 = smul.addr %s168, 8
          %s170 = scalar_lea.vmem [#allocation5], %s169
          %s171 = smul.u32 %s22, 4
          %s172 = sadd.s32 %s171, %s23
          %p173 = scmp.lt.s32.totalorder %s172, 3
          %s174 = scalar_select %p173, %s172, 3
          %176 = vsyncadd %s167, 0
          %s177 = smul.addr %s174, 8
          %s178 = scalar_lea.hbm %s1, %s177
          %s180 = sshll.u32 %s178, 4
          %s181 = int_to_ptr.hbm [resolvable:$true] %s180
          %s182 = sshll.u32 %s170, 4
          %s183 = int_to_ptr.vmem [resolvable:$true] %s182
          %185 = dma.hbm_to_vmem [thread:$0]  %s181, 128, %s183, %s167
        $region24: #{tpu_custom_call.1} parent=15 // pred_fallthru
          _
      $region16: #{tpu_custom_call.1} parent=5 // pred_fallthru
        _
      %p186 = scmp.le.s32.totalorder 1, %s15
      %p187 = scmp.lt.s32.totalorder %s15, 5
      %p188 = pnand %p186, %p187
      %p189 = pneg %p188
      // Predicated region
      $region25: #{tpu_custom_call.1} parent=5 // pred_check
        _
      $region26: #{tpu_custom_call.1} parent=5 // pred_check_branch
        %191 = sbr.rel (%p188) target = $region28
      $region27: #{tpu_custom_call.1} parent=5 // pred_region
        %s192 = ssub.s32 %s15, 1
        %s193 = sand.u32 %s48, 1
        %s194 = scalar_lea.sflag [#allocation3], %s193
        %s195 = sand.u32 %s48, 1
        %s196 = smul.addr %s195, 8
        %s197 = scalar_lea.vmem [#allocation2], %s196
        // Predicated region
        $region29: #{tpu_custom_call.1} parent=27 // pred_check
          %p198 = pneg %p61
        $region30: #{tpu_custom_call.1} parent=27 // pred_check_branch
          %200 = sbr.rel (%p198) target = $region32
        $region31: #{tpu_custom_call.1} parent=27 // pred_region
          %202 = dma.done %s194, 128
        $region32: #{tpu_custom_call.1} parent=27 // pred_fallthru
          _
        %s203 = sand.u32 %s82, 1
        %s204 = scalar_lea.sflag [#allocation6], %s203
        %s205 = sand.u32 %s82, 1
        %s206 = smul.addr %s205, 8
        %s207 = scalar_lea.vmem [#allocation5], %s206
        // Predicated region
        $region33: #{tpu_custom_call.1} parent=27 // pred_check
          %p208 = pneg %p95
        $region34: #{tpu_custom_call.1} parent=27 // pred_check_branch
          %210 = sbr.rel (%p208) target = $region36
        $region35: #{tpu_custom_call.1} parent=27 // pred_region
          %212 = dma.done %s204, 128
        $region36: #{tpu_custom_call.1} parent=27 // pred_fallthru
          _
        %s213 = sand.u32 %s48, 1
        %s214 = scalar_lea.sflag [#allocation3], %s213
        %s215 = sand.u32 %s48, 1
        %s216 = smul.addr %s215, 8
        %s217 = scalar_lea.vmem [#allocation2], %s216
        %p218 = pneg %p61
        %p219 = pneg %p58
        %s220 = sand.u32 %s82, 1
        %s221 = scalar_lea.sflag [#allocation6], %s220
        %s222 = sand.u32 %s82, 1
        %s223 = smul.addr %s222, 8
        %s224 = scalar_lea.vmem [#allocation5], %s223
        %p225 = pneg %p95
        %p226 = pneg %p92
        %p227 = pneg %p121
        %p228 = pneg %p118
        %s229 = smul.u32 %s24, 4
        %s230 = sadd.s32 %s229, %s25
        %p231 = scmp.lt.s32.totalorder %s230, 3
        %s232 = scalar_select %p231, %s230, 3
        %s233 = smul.u32 %s24, 4
        %s234 = sadd.s32 %s233, %s25
        %p235 = scmp.lt.s32.totalorder %s234, 3
        %s236 = scalar_select %p235, %s234, 3
        %p237 = scmp.eq.s32.totalorder %s25, 0
        // Predicated region
        $region37: #{tpu_custom_call.1} parent=27 // pred_check
          %p238 = pneg %p237
        $region38: #{tpu_custom_call.1} parent=27 // pred_check_branch
          %240 = sbr.rel (%p238) target = $region40
        $region39: #{tpu_custom_call.1} parent=27 // pred_region
          %241 = vst [vmem:[#allocation7] sm:$0xff] 0.0
        $region40: #{tpu_custom_call.1} parent=27 // pred_fallthru
          _
        %s242 = smul.u32 %s24, 4
        %s243 = sadd.s32 %s242, %s25
        %s244 = smul.u32 %s243, 8
        %v245 = vld [vmem:[%s197] sm:$0xff]
        %v246 = vld [vmem:[%s207] sm:$0xff]
        %v247 = vlaneseq
        %v248 = vshrl.u32 %v247, 7
        %v249 = vstv %s244
        %v250 = vadd.s32 %v249, %v248
        %vm251 = vcmp.eq.f32.partialorder %v246, %v246
        %vm252 = vcmp.lt.s32.totalorder %v250, 26
        %vm253 = vmand %vm251, %vm252
        %v254 = vsub.f32 %v245, %v246
        %v255 = vsel %vm253, %v254, 0.0
        %v256 = vmul.f32 %v255, %v255
        %v257 = vld [vmem:[#allocation7] sm:$0xff]
        %v258 = vadd.f32 %v256, 0.0
        %v259 = vadd.f32 %v257, %v258
        %260 = vst [vmem:[#allocation7] sm:$0xff] %v259
        // Predicated region
        $region41: #{tpu_custom_call.1} parent=27 // pred_check
          %p261 = pneg %p118
        $region42: #{tpu_custom_call.1} parent=27 // pred_check_branch
          %263 = sbr.rel (%p261) target = $region44
        $region43: #{tpu_custom_call.1} parent=27 // pred_region
          %265 = vsyncadd [#allocation4], 0
          %s266 = smul.addr %s24, 8
          %s267 = scalar_lea.hbm %s2, %s266
          %s269 = sshll.u32 [#allocation7], 4
          %s270 = int_to_ptr.vmem [resolvable:$true] %s269
          %s271 = sshll.u32 %s267, 4
          %s272 = int_to_ptr.hbm [resolvable:$true] %s271
          %274 = dma.vmem_to_hbm [thread:$0]  %s270, 128, %s272, [#allocation4]
        $region44: #{tpu_custom_call.1} parent=27 // pred_fallthru
          _
        // Predicated region
        $region45: #{tpu_custom_call.1} parent=27 // pred_check
          %p275 = pneg %p118
        $region46: #{tpu_custom_call.1} parent=27 // pred_check_branch
          %277 = sbr.rel (%p275) target = $region48
        $region47: #{tpu_custom_call.1} parent=27 // pred_region
          %279 = dma.done [#allocation4], 128
        $region48: #{tpu_custom_call.1} parent=27 // pred_fallthru
          _
      $region28: #{tpu_custom_call.1} parent=5 // pred_fallthru
        _
      %p280 = scmp.le.s32.totalorder 2, %s15
      // Predicated region
      $region49: #{tpu_custom_call.1} parent=5 // pred_check
        %p281 = pneg %p280
      $region50: #{tpu_custom_call.1} parent=5 // pred_check_branch
        %283 = sbr.rel (%p281) target = $region52
      $region51: #{tpu_custom_call.1} parent=5 // pred_region
        %s284 = ssub.s32 %s15, 2
      $region52: #{tpu_custom_call.1} parent=5 // pred_fallthru
        _
    $region6: #{tpu_custom_call.1} parent=1 // loop_footer
      %s19 = sadd.s32 1, %s15
    $region7: #{tpu_custom_call.1} parent=1 // loop_footer_branch
      %14 = sbr.rel target = $region3
    $region8: #{tpu_custom_call.1} parent=1 // loop_exit
      _
    %285 = vsyncpa [#allocation3], 1
    %s286 = scalar_lea.sflag [#allocation3], 1
    %287 = vsyncpa %s286, 1
    %288 = vsyncpa [#allocation6], 1
    %s289 = scalar_lea.sflag [#allocation6], 1
    %290 = vsyncpa %s289, 1
    %291 = vsyncpa [#allocation4], 1
    %s292 = scalar_lea.sflag [#allocation4], 1
    %293 = vsyncpa %s292, 1

</llo_original>
